<compile_context>
chip_gen: v6e
topology: v6e:2x2x1
jax: 0.10.0
libtpu: 0.0.40
codegen_flags: <defaults>
</compile_context>

<pallas_src>
import functools
import math

import jax
import jax.numpy as jnp
from jax.experimental import pallas as pl
from jax.experimental.pallas import tpu as pltpu


def _round_up(n, m):
    return ((n + m - 1) // m) * m


def _tcn_kernel(*refs, K, C_in, dilation, left_pad, L_tile, active, has_halo):
    # refs (in order): [halo_ref?], x_ref, w_ref, b_ref, o_ref, rhs_ref
    #   halo_ref: (1, 1, C_in, P)      left halo for this (batch, time-tile)
    #   x_ref:    (1, C_in, L_tile)    main input tile (x dtype, e.g. f32)
    #   w_ref:    (C_out, K*C_in)      weight-normed taps, bf16, VMEM-resident
    #   b_ref:    (C_out, 1)           f32 bias
    #   o_ref:    (1, C_out, L_tile)   lane-dense output tile
    #   rhs_ref:  (K*C_in, L_tile)     VMEM scratch: sublane-stacked tap windows
    if has_halo:
        halo_ref, x_ref, w_ref, b_ref, o_ref, rhs_ref = refs
    else:
        x_ref, w_ref, b_ref, o_ref, rhs_ref = refs
        halo_ref = None

    # Build the stacked RHS: row block k holds tap k's window, i.e. columns
    # [k*dilation, k*dilation + L_tile) of the virtual window [halo | main].
    # All offsets are static -> plain (masked) vector stores, no gathers.
    for k in range(K):
        start = k * dilation
        h = min(max(left_pad - start, 0), L_tile)     # columns sourced from the halo
        r0, r1 = k * C_in, (k + 1) * C_in
        if h > 0:
            rhs_ref[r0:r1, 0:h] = halo_ref[0, 0, :, start:start + h]
        if h < L_tile:
            rhs_ref[r0:r1, h:L_tile] = x_ref[0, :, 0:L_tile - h]

    # Single fused MXU matmul over the K*C_in contraction (bf16 operands,
    # f32 accumulation).  For very large C_out*L_tile, block C_out instead.
    acc = jnp.dot(w_ref[...], rhs_ref[...].astype(jnp.bfloat16),
                  preferred_element_type=jnp.float32)
    acc = acc + b_ref[...]                            # (C_out, 1) broadcast on lanes
    if active:
        acc = jnp.maximum(acc, 0.0)
    o_ref[0] = acc.astype(o_ref.dtype)


def tcn_block_forward(x_ncl, v, g, bias, *, kernel_size, stride, dilation,
                      active=True, l_tile=512, out_dtype=None):
    """Forward pass of TCNBlock (eval semantics: dropout = identity).

    x_ncl : (B, C_in, L)      activations, PyTorch NCL conv layout
    v     : (C_out, C_in, K)  weight_norm "v" parameter
    g     : (C_out,)          weight_norm "g" parameter
    bias  : (C_out,)          conv bias
    Returns (B, C_out, L_out), matching nn.Conv1d output layout.
    """
    B, C_in, L = x_ncl.shape
    C_out = v.shape[0]
    K = kernel_size
    P = (K - 1) * dilation                            # causal left padding
    out_dtype = x_ncl.dtype if out_dtype is None else out_dtype

    # ---- weight_norm (dim=0): f32 math, then bf16 for the MXU --------------
    # No epsilon, matching PyTorch weight_norm (zero filter row -> NaN there too).
    v_norm = jnp.sqrt(jnp.sum(v * v, axis=(1, 2), keepdims=True))
    W = (g[:, None, None] / v_norm) * v                            # (C_out, C_in, K)
    # Fused-tap layout: W2[o, k*C_in + i] = W[o, i, k]
    W2 = jnp.transpose(W, (0, 2, 1)).reshape(C_out, K * C_in).astype(jnp.bfloat16)
    bias2d = bias.astype(jnp.float32).reshape(C_out, 1)

    # ---- time tiling of the stride-1 output (length L) ---------------------
    # Lane-dense tiles (multiples of 128); prefer a tile that divides L so the
    # trailing pad + final slice are skipped entirely.
    l_tile = max(128, (int(l_tile) // 128) * 128)
    L_tile = None
    if L % 128 == 0:
        t = min(l_tile, L)
        while t >= 128:
            if L % t == 0:
                L_tile = t
                break
            t -= 128
    if L_tile is None:
        L_tile = min(l_tile, _round_up(L, 128))
    n_t = -(-L // L_tile)
    # v7x has 2 TensorCores; make sure the "parallel" grid has >= 2 steps.
    if B * n_t < 2 and L_tile > 128:
        L_tile = max(128, _round_up(-(-L // 2), 128))
        n_t = -(-L // L_tile)
    L_main = n_t * L_tile

    # ---- inputs -------------------------------------------------------------
    # Main tiles come straight from x (zero-copy when L_main == L).
    x_main = x_ncl if L_main == L else jnp.pad(
        x_ncl, ((0, 0), (0, 0), (0, L_main - L)))

    inputs = []
    in_specs = []
    has_halo = P > 0
    if has_halo:
        # Tiny per-tile left halos (B, n_t, C_in, P): tile t gets the P samples
        # preceding it; negative indices are the causal zero pad.
        cols = (jnp.arange(n_t) * L_tile)[:, None] + jnp.arange(P)[None, :] - P
        halo = jnp.where((cols >= 0)[None, None],
                         x_ncl[:, :, jnp.clip(cols, 0, L - 1)],
                         0.0).astype(x_ncl.dtype)
        halo = jnp.transpose(halo, (0, 2, 1, 3))                   # (B, n_t, C_in, P)
        inputs.append(halo)
        in_specs.append(pl.BlockSpec((1, 1, C_in, P), lambda b, t: (b, t, 0, 0)))

    inputs += [x_main, W2, bias2d]
    in_specs += [
        pl.BlockSpec((1, C_in, L_tile), lambda b, t: (b, 0, t)),
        # Constant index_maps: weights/bias stay VMEM-resident across the grid.
        pl.BlockSpec((C_out, K * C_in), lambda b, t: (0, 0)),
        pl.BlockSpec((C_out, 1), lambda b, t: (0, 0)),
    ]

    kernel = functools.partial(
        _tcn_kernel, K=K, C_in=C_in, dilation=dilation, left_pad=P,
        L_tile=L_tile, active=active, has_halo=has_halo)

    # Generation-gated VMEM budget: ~48 MiB on v7x (64 MiB/TC), ~96 MiB on
    # v5e/v6e (128 MiB).  Falls back to the safe-everywhere 48 MiB.
    try:
        vmem_cap = pltpu.get_tpu_info().vmem_capacity_bytes
    except Exception:
        vmem_cap = 64 * 1024 * 1024
    vmem_limit = max(16 * 1024 * 1024,
                     min(int(0.75 * vmem_cap), 96 * 1024 * 1024))

    y = pl.pallas_call(
        kernel,
        out_shape=jax.ShapeDtypeStruct((B, C_out, L_main), out_dtype),
        grid_spec=pltpu.PrefetchScalarGridSpec(
            num_scalar_prefetch=0,
            grid=(B, n_t),
            in_specs=in_specs,
            out_specs=pl.BlockSpec((1, C_out, L_tile), lambda b, t: (b, 0, t)),
            scratch_shapes=[pltpu.VMEM((K * C_in, L_tile), x_ncl.dtype)],
        ),
        compiler_params=pltpu.CompilerParams(
            dimension_semantics=("parallel", "parallel"),
            vmem_limit_bytes=vmem_limit,
        ),
    )(*inputs)

    # TODO(synk): nn.Dropout is identity here (inference/eval semantics).
    if stride > 1:
        # TODO(synk): stride > 1 is computed as the stride-1 conv + subsampling
        # (correct but does stride-x the necessary work); fold the stride into
        # the wrapper windowing if this path ever becomes hot.
        y = y[:, :, :L:stride]
    elif L_main != L:
        y = y[:, :, :L]
    return y


def _reference(x_ncl, v, g, bias, *, kernel_size, stride, dilation, active):
    """Pure-JAX (f32) reference identical to the PyTorch forward (dropout=identity)."""
    K = kernel_size
    v_norm = jnp.sqrt(jnp.sum(v * v, axis=(1, 2), keepdims=True))
    W = (g[:, None, None] / v_norm) * v
    left_pad = (K - 1) * dilation
    xp = jnp.pad(x_ncl, ((0, 0), (0, 0), (left_pad, 0)))
    y = jax.lax.conv_general_dilated(
        xp, W, window_strides=(stride,), padding="VALID",
        rhs_dilation=(dilation,), dimension_numbers=("NCH", "OIH", "NCH"),
    )
    y = y + bias[None, :, None]
    if active:
        y = jnp.maximum(y, 0.0)
    return y


if __name__ == "__main__":
    key = jax.random.PRNGKey(0)

    def make_params(k, C_in, C_out, K):
        kv, kb = jax.random.split(k)
        # init_weights(): conv.weight.data.normal_(0, 0.01). With weight_norm, v gets
        # this init and g = ||v|| per out channel, so the effective weight equals v.
        v = 0.01 * jax.random.normal(kv, (C_out, C_in, K), dtype=jnp.float32)
        g = jnp.sqrt(jnp.sum(v * v, axis=(1, 2)))
        bound = 1.0 / math.sqrt(C_in * K)     # Conv1d bias default init U(-b, b)
        bias = jax.random.uniform(kb, (C_out,), minval=-bound, maxval=bound,
                                  dtype=jnp.float32)
        return v, g, bias

    k1, k2, k3, kx1, kx2, kx3 = jax.random.split(key, 6)

    # Case 1: TCNBlock(8, 16, kernel_size=3, stride=1, dilation=2, dropout=0.1)
    B, C_in, C_out, L = 2, 8, 16, 16
    K, stride, dilation = 3, 1, 2
    x = jax.random.normal(kx1, (B, C_in, L), dtype=jnp.float32)
    v, g, bias = make_params(k1, C_in, C_out, K)
    fwd = jax.jit(functools.partial(tcn_block_forward, kernel_size=K, stride=stride,
                                    dilation=dilation, active=True))
    y = jax.block_until_ready(fwd(x, v, g, bias))
    y_ref = _reference(x, v, g, bias, kernel_size=K, stride=stride,
                       dilation=dilation, active=True)
    assert y.shape == y_ref.shape, (y.shape, y_ref.shape)
    assert jnp.allclose(y, y_ref, atol=1e-2, rtol=1e-2), "case 1 mismatch vs reference"

    # Case 2: longer sequence -> multi-tile path with non-trivial halos, active=False.
    B2, C_in2, C_out2, L2 = 2, 8, 16, 640
    K2, s2, d2 = 3, 1, 4
    x2 = jax.random.normal(kx2, (B2, C_in2, L2), dtype=jnp.float32)
    v2, g2, b2 = make_params(k2, C_in2, C_out2, K2)
    fwd2 = jax.jit(functools.partial(tcn_block_forward, kernel_size=K2, stride=s2,
                                     dilation=d2, active=False, l_tile=256))
    y2 = jax.block_until_ready(fwd2(x2, v2, g2, b2))
    y2_ref = _reference(x2, v2, g2, b2, kernel_size=K2, stride=s2,
                        dilation=d2, active=False)
    assert y2.shape == y2_ref.shape, (y2.shape, y2_ref.shape)
    assert jnp.allclose(y2, y2_ref, atol=1e-2, rtol=1e-2), "case 2 mismatch vs reference"

    # Case 3: batch 1 (forces >=2 time tiles for the 2-TC grid) and stride 2.
    B3, C_in3, C_out3, L3 = 1, 8, 16, 300
    K3, s3, d3 = 3, 2, 2
    x3 = jax.random.normal(kx3, (B3, C_in3, L3), dtype=jnp.float32)
    v3, g3, b3 = make_params(k3, C_in3, C_out3, K3)
    fwd3 = jax.jit(functools.partial(tcn_block_forward, kernel_size=K3, stride=s3,
                                     dilation=d3, active=True))
    y3 = jax.block_until_ready(fwd3(x3, v3, g3, b3))
    y3_ref = _reference(x3, v3, g3, b3, kernel_size=K3, stride=s3,
                        dilation=d3, active=True)
    assert y3.shape == y3_ref.shape, (y3.shape, y3_ref.shape)
    assert jnp.allclose(y3, y3_ref, atol=1e-2, rtol=1e-2), "case 3 mismatch vs reference"

    print("KERNEL_OK")
</pallas_src>

<mosaic_0001>
module attributes {stable_mosaic.version = 11 : i64} {
  func.func @_tcn_kernel(%arg0: i32, %arg1: i32, %arg2: memref<1x1x8x4xf32, #tpu.memory_space<vmem>>, %arg3: memref<1x8x128xf32, #tpu.memory_space<vmem>>, %arg4: memref<16x24xbf16, #tpu.memory_space<vmem>>, %arg5: memref<16x1xf32, #tpu.memory_space<vmem>>, %arg6: memref<1x16x128xf32, #tpu.memory_space<vmem>>, %arg7: memref<24x128xf32, #tpu.memory_space<vmem>>) attributes {dimension_semantics = [#tpu.dimension_semantics<parallel>, #tpu.dimension_semantics<parallel>], iteration_bounds = array<i64: 2, 1>, scalar_prefetch = 0 : i64, scratch_operands = 1 : i64, tpu.core_type = #tpu.core_type<tc>, window_params = [{transform_indices = @transform_0, window_bounds = array<i64: 1, 1, 8, 4>}, {transform_indices = @transform_1, window_bounds = array<i64: 1, 8, 128>}, {pipeline_mode = #tpu.pipeline_mode<synchronous>, transform_indices = @transform_2, window_bounds = array<i64: 16, 24>}, {pipeline_mode = #tpu.pipeline_mode<synchronous>, transform_indices = @transform_3, window_bounds = array<i64: 16, 1>}, {transform_indices = @transform_4, window_bounds = array<i64: 1, 16, 128>}]} {
    %c0 = arith.constant 0 : index
    %c0_0 = arith.constant 0 : index
    %c0_1 = arith.constant 0 : index
    %c0_2 = arith.constant 0 : index
    %0 = vector.load %arg2[%c0, %c0_0, %c0_1, %c0_2] : memref<1x1x8x4xf32, #tpu.memory_space<vmem>>, vector<1x1x8x4xf32>
    %1 = vector.shape_cast %0 : vector<1x1x8x4xf32> to vector<8x4xf32>
    %c0_3 = arith.constant 0 : index
    %c0_4 = arith.constant 0 : index
    %2 = vector.load %arg7[%c0_3, %c0_4] : memref<24x128xf32, #tpu.memory_space<vmem>>, vector<8x4xf32>
    tpu.vector_store %arg7[%c0_3, %c0_4], %1 {strides = array<i32>} : memref<24x128xf32, #tpu.memory_space<vmem>>, vector<8x4xf32>,
    %c0_5 = arith.constant 0 : index
    %c0_6 = arith.constant 0 : index
    %c0_7 = arith.constant 0 : index
    %3 = vector.load %arg3[%c0_5, %c0_6, %c0_7] : memref<1x8x128xf32, #tpu.memory_space<vmem>>, vector<1x8x124xf32>
    %4 = vector.shape_cast %3 : vector<1x8x124xf32> to vector<8x124xf32>
    %c0_8 = arith.constant 0 : index
    %c4 = arith.constant 4 : index
    %5 = vector.load %arg7[%c0_8, %c4] : memref<24x128xf32, #tpu.memory_space<vmem>>, vector<8x124xf32>
    tpu.vector_store %arg7[%c0_8, %c4], %4 {strides = array<i32>} : memref<24x128xf32, #tpu.memory_space<vmem>>, vector<8x124xf32>,
    %c0_9 = arith.constant 0 : index
    %c0_10 = arith.constant 0 : index
    %c0_11 = arith.constant 0 : index
    %c2 = arith.constant 2 : index
    %6 = vector.load %arg2[%c0_9, %c0_10, %c0_11, %c2] : memref<1x1x8x4xf32, #tpu.memory_space<vmem>>, vector<1x1x8x2xf32>
    %7 = vector.shape_cast %6 : vector<1x1x8x2xf32> to vector<8x2xf32>
    %c8 = arith.constant 8 : index
    %c0_12 = arith.constant 0 : index
    %8 = vector.load %arg7[%c8, %c0_12] : memref<24x128xf32, #tpu.memory_space<vmem>>, vector<8x2xf32>
    tpu.vector_store %arg7[%c8, %c0_12], %7 {strides = array<i32>} : memref<24x128xf32, #tpu.memory_space<vmem>>, vector<8x2xf32>,
    %c0_13 = arith.constant 0 : index
    %c0_14 = arith.constant 0 : index
    %c0_15 = arith.constant 0 : index
    %9 = vector.load %arg3[%c0_13, %c0_14, %c0_15] : memref<1x8x128xf32, #tpu.memory_space<vmem>>, vector<1x8x126xf32>
    %10 = vector.shape_cast %9 : vector<1x8x126xf32> to vector<8x126xf32>
    %c8_16 = arith.constant 8 : index
    %c2_17 = arith.constant 2 : index
    %11 = vector.load %arg7[%c8_16, %c2_17] : memref<24x128xf32, #tpu.memory_space<vmem>>, vector<8x126xf32>
    tpu.vector_store %arg7[%c8_16, %c2_17], %10 {strides = array<i32>} : memref<24x128xf32, #tpu.memory_space<vmem>>, vector<8x126xf32>,
    %c0_18 = arith.constant 0 : index
    %c0_19 = arith.constant 0 : index
    %c0_20 = arith.constant 0 : index
    %12 = vector.load %arg3[%c0_18, %c0_19, %c0_20] : memref<1x8x128xf32, #tpu.memory_space<vmem>>, vector<1x8x128xf32>
    %13 = vector.shape_cast %12 : vector<1x8x128xf32> to vector<8x128xf32>
    %c16 = arith.constant 16 : index
    %c0_21 = arith.constant 0 : index
    %14 = vector.load %arg7[%c16, %c0_21] : memref<24x128xf32, #tpu.memory_space<vmem>>, vector<8x128xf32>
    tpu.vector_store %arg7[%c16, %c0_21], %13 {strides = array<i32>} : memref<24x128xf32, #tpu.memory_space<vmem>>, vector<8x128xf32>,
    %c0_22 = arith.constant 0 : index
    %c0_23 = arith.constant 0 : index
    %15 = vector.load %arg4[%c0_22, %c0_23] : memref<16x24xbf16, #tpu.memory_space<vmem>>, vector<16x24xbf16>
    %c0_24 = arith.constant 0 : index
    %c0_25 = arith.constant 0 : index
    %16 = vector.load %arg7[%c0_24, %c0_25] : memref<24x128xf32, #tpu.memory_space<vmem>>, vector<24x128xf32>
    %17 = arith.truncf %16 : vector<24x128xf32> to vector<24x128xbf16>
    %cst = arith.constant dense<0.000000e+00> : vector<16x128xf32>
    %18 = tpu.matmul %15, %17, %cst {dimension_numbers = #tpu.dot_dimension_numbers<[1], [0], [0], [1], [0, 0, 1, 1], [], []>} : vector<16x24xbf16>, vector<24x128xbf16>, vector<16x128xf32> -> vector<16x128xf32>
    %c0_26 = arith.constant 0 : index
    %c0_27 = arith.constant 0 : index
    %19 = vector.load %arg5[%c0_26, %c0_27] : memref<16x1xf32, #tpu.memory_space<vmem>>, vector<16x1xf32>
    %20 = vector.broadcast %19 : vector<16x1xf32> to vector<16x128xf32>
    %21 = arith.addf %18, %20 : vector<16x128xf32>
    %cst_28 = arith.constant 0.000000e+00 : f32
    %22 = vector.broadcast %cst_28 : f32 to vector<16x128xf32>
    %23 = arith.maximumf %21, %22 : vector<16x128xf32>
    %c0_29 = arith.constant 0 : index
    %c0_30 = arith.constant 0 : index
    %c0_31 = arith.constant 0 : index
    %24 = vector.load %arg6[%c0_29, %c0_30, %c0_31] : memref<1x16x128xf32, #tpu.memory_space<vmem>>, vector<1x16x128xf32>
    %25 = vector.shape_cast %24 : vector<1x16x128xf32> to vector<16x128xf32>
    %26 = vector.shape_cast %23 : vector<16x128xf32> to vector<1x16x128xf32>
    tpu.vector_store %arg6[%c0_29, %c0_30, %c0_31], %26 {strides = array<i32>} : memref<1x16x128xf32, #tpu.memory_space<vmem>>, vector<1x16x128xf32>,
    return
  }
  func.func @transform_0(%arg0: i32, %arg1: i32) -> (i32, i32, i32, i32) {
    %c0_i32 = arith.constant 0 : i32
    %c0_i32_0 = arith.constant 0 : i32
    %c0_i32_1 = arith.constant 0 : i32
    return %arg0, %arg1, %c0_i32, %c0_i32_0 : i32, i32, i32, i32
  }
  func.func @transform_1(%arg0: i32, %arg1: i32) -> (i32, i32, i32) {
    %c0_i32 = arith.constant 0 : i32
    %c0_i32_0 = arith.constant 0 : i32
    return %arg0, %c0_i32, %arg1 : i32, i32, i32
  }
  func.func @transform_2(%arg0: i32, %arg1: i32) -> (i32, i32) {
    %c0_i32 = arith.constant 0 : i32
    %c0_i32_0 = arith.constant 0 : i32
    %c0_i32_1 = arith.constant 0 : i32
    return %c0_i32, %c0_i32_0 : i32, i32
  }
  func.func @transform_3(%arg0: i32, %arg1: i32) -> (i32, i32) {
    %c0_i32 = arith.constant 0 : i32
    %c0_i32_0 = arith.constant 0 : i32
    %c0_i32_1 = arith.constant 0 : i32
    return %c0_i32, %c0_i32_0 : i32, i32
  }
  func.func @transform_4(%arg0: i32, %arg1: i32) -> (i32, i32, i32) {
    %c0_i32 = arith.constant 0 : i32
    %c0_i32_0 = arith.constant 0 : i32
    return %arg0, %c0_i32, %arg1 : i32, i32, i32
  }
}

</mosaic_0001>

<llo_original>
// kernel: tcn_block_forward.1
$region0: #{tcn_block_forward.1}
  #allocation0 [shape = 'u32[]', space=smem, size = 0x4, offset = 0x4, fixed_abs, tag = 'smem constant byte address 0x4 - core index']
  #allocation1 [shape = 'u32[144,128]{1,0:T(1,128)}', space=vmem, size = 0x12000, scoped, tag = 'internal scratch']
  #allocation2 [shape = 'f32[24,128]{1,0:T(8,128)}', space=vmem, size = 0x3000, scoped, tag = 'scratch operand']
  %s0 = inlined_call_operand.vmem [shape: f32[2,1,8,4], index: 0, kind: input, shape index: {}]
  %s1 = inlined_call_operand.vmem [shape: f32[2,8,128], index: 1, kind: input, shape index: {}]
  %s2 = inlined_call_operand.vmem [shape: bf16[16,24], index: 2, kind: input, shape index: {}]
  %s3 = inlined_call_operand.vmem [shape: f32[16,1], index: 3, kind: input, shape index: {}]
  %s4 = inlined_call_operand.hbm [shape: f32[2,16,128], index: 4, kind: output, shape index: {}]
  %s5 = sld [smem:[#allocation0]]
  $region49: #{tcn_block_forward.1} parent=0
    _
  %s7 = ssub.s32 1, %s5
  %s8 = scalar_select 0, %s7, %s5
  $region1: #{tcn_block_forward.1} parent=0
    #allocation3 [shape = 'u8[16384]{0}', space=vmem, size = 0x4000, scoped, tag = 'output window, operand 0']
    #allocation4 [shape = 's32[2]{0}', space=sflag, size = 0x8, scoped, tag = 'scoped memory for tcn_block_forward.1']
    %9 = vsyncpa [#allocation4], 0
    %s10 = scalar_lea.sflag [#allocation4], 1
    %11 = vsyncpa %s10, 0
    loop: start=0, step=1, limit=4
    $region2: #{tcn_block_forward.1} parent=1 // loop_pre_header
      _
    $region3: #{tcn_block_forward.1} parent=1 // loop_header
      %s13 = sphi 0, %s17
      %p14 = scmp.ge.s32.totalorder %s13, 4
      %s20 = sphi 0, %s32
      %s21 = sphi 0, %s28
      %s22 = sphi 0, %s20
      %s23 = sphi 0, %s21
      %s24 = sphi 0, %s22
      %s25 = sphi 0, %s23
      %s37 = sphi 0, %s39
      %s40 = sphi 0, %s37
      %s41 = sphi 0, %s40
      %s57 = sphi 0, %s41
      %s65 = sphi 0, %s67
      %s68 = sphi 0, %s65
      %s69 = sphi 0, %s68
      %s85 = sphi 0, %s69
      %s89 = sphi 0, %s89
      %s91 = sphi 0, %s89
      %s92 = sphi 0, %s91
      %s106 = sphi 0, %s92
      %s110 = sphi 0, %s110
      %s112 = sphi 0, %s110
      %s113 = sphi 0, %s112
      %s127 = sphi 0, %s113
      %s135 = sphi 0, %s137
      %s138 = sphi 0, %s135
      %s139 = sphi 0, %s138
      %s155 = sphi 0, %s139
    $region4: #{tcn_block_forward.1} parent=1 // loop_header_branch
      %16 = sbr.rel (%p14) target = $region8
    $region5: #{tcn_block_forward.1} parent=1 // loop_body
      %s18 = ssub.s32 %s13, 1
      %s19 = ssub.s32 %s13, 2
      %s26 = sadd.s32 1, %s21
      %p27 = scmp.ge.s32.totalorder %s26, 1
      %s28 = scalar_select %p27, 0, %s26
      %s29 = sadd.s32 1, %s20
      %s30 = scalar_select %p27, %s29, %s20
      %p31 = scmp.ge.s32.totalorder %s30, 2
      %s32 = scalar_select %p31, 0, %s30
      %s33 = ssub.s32 %s20, %s32
      %s34 = ssub.s32 %s21, %s28
      %s35 = sor.u32 %s33, %s34
      %p36 = scmp.eq.s32.totalorder %s35, 0
      %s38 = sadd.s32 %s37, 1
      %s39 = scalar_select %p36, %s37, %s38
      %p42 = pneg %p36
      %p43 = scmp.eq.s32.totalorder %s13, 1
      %p44 = por %p42, %p43
      %p45 = scmp.ne.s32.totalorder %s37, %s40
      %p46 = scmp.eq.s32.totalorder %s13, 0
      %p47 = por %p45, %p46
      %p48 = scmp.ne.s32.totalorder %s37, %s40
      %p49 = scmp.eq.s32.totalorder %s18, 1
      %p50 = por %p48, %p49
      %p51 = scmp.ne.s32.totalorder %s40, %s41
      %p52 = scmp.eq.s32.totalorder %s18, 0
      %p53 = por %p51, %p52
      %p54 = scmp.ne.s32.totalorder %s40, %s41
      %p55 = scmp.eq.s32.totalorder %s19, 1
      %p56 = por %p54, %p55
      %p58 = scmp.ne.s32.totalorder %s41, %s57
      %p59 = scmp.eq.s32.totalorder %s19, 0
      %p60 = por %p58, %p59
      %s61 = ssub.s32 %s20, %s32
      %s62 = ssub.s32 %s21, %s28
      %s63 = sor.u32 %s61, %s62
      %p64 = scmp.eq.s32.totalorder %s63, 0
      %s66 = sadd.s32 %s65, 1
      %s67 = scalar_select %p64, %s65, %s66
      %p70 = pneg %p64
      %p71 = scmp.eq.s32.totalorder %s13, 1
      %p72 = por %p70, %p71
      %p73 = scmp.ne.s32.totalorder %s65, %s68
      %p74 = scmp.eq.s32.totalorder %s13, 0
      %p75 = por %p73, %p74
      %p76 = scmp.ne.s32.totalorder %s65, %s68
      %p77 = scmp.eq.s32.totalorder %s18, 1
      %p78 = por %p76, %p77
      %p79 = scmp.ne.s32.totalorder %s68, %s69
      %p80 = scmp.eq.s32.totalorder %s18, 0
      %p81 = por %p79, %p80
      %p82 = scmp.ne.s32.totalorder %s68, %s69
      %p83 = scmp.eq.s32.totalorder %s19, 1
      %p84 = por %p82, %p83
      %p86 = scmp.ne.s32.totalorder %s69, %s85
      %p87 = scmp.eq.s32.totalorder %s19, 0
      %p88 = por %p86, %p87
      %s90 = sadd.s32 %s89, 1
      %p93 = scmp.eq.s32.totalorder %s13, 1
      %p94 = scmp.ne.s32.totalorder %s89, %s91
      %p95 = scmp.eq.s32.totalorder %s13, 0
      %p96 = por %p94, %p95
      %p97 = scmp.ne.s32.totalorder %s89, %s91
      %p98 = scmp.eq.s32.totalorder %s18, 1
      %p99 = por %p97, %p98
      %p100 = scmp.ne.s32.totalorder %s91, %s92
      %p101 = scmp.eq.s32.totalorder %s18, 0
      %p102 = por %p100, %p101
      %p103 = scmp.ne.s32.totalorder %s91, %s92
      %p104 = scmp.eq.s32.totalorder %s19, 1
      %p105 = por %p103, %p104
      %p107 = scmp.ne.s32.totalorder %s92, %s106
      %p108 = scmp.eq.s32.totalorder %s19, 0
      %p109 = por %p107, %p108
      %s111 = sadd.s32 %s110, 1
      %p114 = scmp.eq.s32.totalorder %s13, 1
      %p115 = scmp.ne.s32.totalorder %s110, %s112
      %p116 = scmp.eq.s32.totalorder %s13, 0
      %p117 = por %p115, %p116
      %p118 = scmp.ne.s32.totalorder %s110, %s112
      %p119 = scmp.eq.s32.totalorder %s18, 1
      %p120 = por %p118, %p119
      %p121 = scmp.ne.s32.totalorder %s112, %s113
      %p122 = scmp.eq.s32.totalorder %s18, 0
      %p123 = por %p121, %p122
      %p124 = scmp.ne.s32.totalorder %s112, %s113
      %p125 = scmp.eq.s32.totalorder %s19, 1
      %p126 = por %p124, %p125
      %p128 = scmp.ne.s32.totalorder %s113, %s127
      %p129 = scmp.eq.s32.totalorder %s19, 0
      %p130 = por %p128, %p129
      %s131 = ssub.s32 %s20, %s32
      %s132 = ssub.s32 %s21, %s28
      %s133 = sor.u32 %s131, %s132
      %p134 = scmp.eq.s32.totalorder %s133, 0
      %s136 = sadd.s32 %s135, 1
      %s137 = scalar_select %p134, %s135, %s136
      %p140 = pneg %p134
      %p141 = scmp.eq.s32.totalorder %s13, 1
      %p142 = por %p140, %p141
      %p143 = scmp.ne.s32.totalorder %s135, %s138
      %p144 = scmp.eq.s32.totalorder %s13, 0
      %p145 = por %p143, %p144
      %p146 = scmp.ne.s32.totalorder %s135, %s138
      %p147 = scmp.eq.s32.totalorder %s18, 1
      %p148 = por %p146, %p147
      %p149 = scmp.ne.s32.totalorder %s138, %s139
      %p150 = scmp.eq.s32.totalorder %s18, 0
      %p151 = por %p149, %p150
      %p152 = scmp.ne.s32.totalorder %s138, %s139
      %p153 = scmp.eq.s32.totalorder %s19, 1
      %p154 = por %p152, %p153
      %p156 = scmp.ne.s32.totalorder %s139, %s155
      %p157 = scmp.eq.s32.totalorder %s19, 0
      %p158 = por %p156, %p157
      %p159 = scmp.le.s32.totalorder 1, %s13
      %p160 = scmp.lt.s32.totalorder %s13, 3
      %p161 = pnand %p159, %p160
      %p162 = pneg %p161
      // Predicated region
      $region9: #{tcn_block_forward.1} parent=5 // pred_check
        _
      $region10: #{tcn_block_forward.1} parent=5 // pred_check_branch
        %164 = sbr.rel (%p161) target = $region12
      $region11: #{tcn_block_forward.1} parent=5 // pred_region
        %s165 = ssub.s32 %s13, 1
        // Predicated region
        $region13: #{tcn_block_forward.1} parent=11 // pred_check
          %p166 = pneg %p102
        $region14: #{tcn_block_forward.1} parent=11 // pred_check_branch
          %168 = sbr.rel (%p166) target = $region16
        $region15: #{tcn_block_forward.1} parent=11 // pred_region
          _
        $region16: #{tcn_block_forward.1} parent=11 // pred_fallthru
          _
        // Predicated region
        $region17: #{tcn_block_forward.1} parent=11 // pred_check
          %p169 = pneg %p123
        $region18: #{tcn_block_forward.1} parent=11 // pred_check_branch
          %171 = sbr.rel (%p169) target = $region20
        $region19: #{tcn_block_forward.1} parent=11 // pred_region
          _
        $region20: #{tcn_block_forward.1} parent=11 // pred_fallthru
          _
      $region12: #{tcn_block_forward.1} parent=5 // pred_fallthru
        _
      %p172 = scmp.lt.s32.totalorder %s13, 2
      // Predicated region
      $region21: #{tcn_block_forward.1} parent=5 // pred_check
        %p173 = pneg %p172
      $region22: #{tcn_block_forward.1} parent=5 // pred_check_branch
        %175 = sbr.rel (%p173) target = $region24
      $region23: #{tcn_block_forward.1} parent=5 // pred_region
        // Predicated region
        $region25: #{tcn_block_forward.1} parent=23 // pred_check
          %p176 = pneg %p47
        $region26: #{tcn_block_forward.1} parent=23 // pred_check_branch
          %178 = sbr.rel (%p176) target = $region28
        $region27: #{tcn_block_forward.1} parent=23 // pred_region
          %p179 = scmp.lt.s32.totalorder %s20, 1
          %s180 = scalar_select %p179, %s20, 1
          %p181 = scmp.lt.s32.totalorder %s21, 0
          %s182 = scalar_select %p181, %s21, 0
          %s183 = sadd.s32 %s182, %s180
          %s184 = smul.addr %s183, 8
          %s185 = scalar_lea.vmem %s0, %s184
        $region28: #{tcn_block_forward.1} parent=23 // pred_fallthru
          _
        // Predicated region
        $region29: #{tcn_block_forward.1} parent=23 // pred_check
          %p186 = pneg %p75
        $region30: #{tcn_block_forward.1} parent=23 // pred_check_branch
          %188 = sbr.rel (%p186) target = $region32
        $region31: #{tcn_block_forward.1} parent=23 // pred_region
          %p189 = scmp.lt.s32.totalorder %s20, 1
          %s190 = scalar_select %p189, %s20, 1
          %p191 = scmp.lt.s32.totalorder %s21, 0
          %s192 = scalar_select %p191, %s21, 0
          %s193 = sadd.s32 %s192, %s190
          %s194 = smul.addr %s193, 8
          %s195 = scalar_lea.vmem %s1, %s194
        $region32: #{tcn_block_forward.1} parent=23 // pred_fallthru
          _
      $region24: #{tcn_block_forward.1} parent=5 // pred_fallthru
        _
      %p196 = scmp.le.s32.totalorder 1, %s13
      %p197 = scmp.lt.s32.totalorder %s13, 3
      %p198 = pnand %p196, %p197
      %p199 = pneg %p198
      // Predicated region
      $region33: #{tcn_block_forward.1} parent=5 // pred_check
        _
      $region34: #{tcn_block_forward.1} parent=5 // pred_check_branch
        %201 = sbr.rel (%p198) target = $region36
      $region35: #{tcn_block_forward.1} parent=5 // pred_region
        %s202 = ssub.s32 %s13, 1
        %p203 = scmp.lt.s32.totalorder %s22, 1
        %s204 = scalar_select %p203, %s22, 1
        %p205 = scmp.lt.s32.totalorder %s23, 0
        %s206 = scalar_select %p205, %s23, 0
        %s207 = sadd.s32 %s206, %s204
        %s208 = smul.addr %s207, 8
        %s209 = scalar_lea.vmem %s0, %s208
        %p210 = pneg %p53
        %p211 = pneg %p50
        %p212 = scmp.lt.s32.totalorder %s22, 1
        %s213 = scalar_select %p212, %s22, 1
        %p214 = scmp.lt.s32.totalorder %s23, 0
        %s215 = scalar_select %p214, %s23, 0
        %s216 = sadd.s32 %s215, %s213
        %s217 = smul.addr %s216, 8
        %s218 = scalar_lea.vmem %s1, %s217
        %p219 = pneg %p81
        %p220 = pneg %p78
        %p221 = pneg %p102
        %p222 = pneg %p99
        %p223 = pneg %p123
        %p224 = pneg %p120
        %p225 = pneg %p151
        %p226 = pneg %p148
        %s227 = sand.u32 %s138, 1
        %s228 = scalar_lea.sflag [#allocation4], %s227
        %s229 = sand.u32 %s138, 1
        %s230 = smul.addr %s229, 16
        %s231 = scalar_lea.vmem [#allocation3], %s230
        %p232 = scmp.lt.s32.totalorder %s22, 1
        %s233 = scalar_select %p232, %s22, 1
        %p234 = scmp.lt.s32.totalorder %s23, 0
        %s235 = scalar_select %p234, %s23, 0
        %s236 = sadd.s32 %s235, %s233
        %s237 = smul.addr %s236, 8
        %s238 = scalar_lea.vmem %s0, %s237
        %p239 = scmp.lt.s32.totalorder %s22, 1
        %s240 = scalar_select %p239, %s22, 1
        %p241 = scmp.lt.s32.totalorder %s23, 0
        %s242 = scalar_select %p241, %s23, 0
        %s243 = sadd.s32 %s242, %s240
        %s244 = smul.addr %s243, 8
        %s245 = scalar_lea.vmem %s1, %s244
        %v247 = vld [vmem:[%s238] sm:$0xff]
        %vm248 = vcmask 31744
        %249 = vst.msk [vmem:[#allocation2] sm:$0xff] %vm248, %v247
        %v250 = vld [vmem:[%s245] sm:$0xff]
        %252 = vrot.lane.b32.xlu0 %v250, 4
        %v253 = vpop.permute.xlu0 %252
        %vm255 = vcmask 1047584
        %256 = vst.msk [vmem:[#allocation2] sm:$0xff] %vm255, %v253
        %v257 = vld [vmem:[%s238] sm:$0xff]
        %259 = vrot.lane.b32.xlu0 %v257, 126
        %v260 = vpop.permute.xlu0 %259
        %vm262 = vcmask 15360
        %263 = vst.msk [vmem:[#allocation2 + $0x8] sm:$0xff] %vm262, %v260
        %v264 = vld [vmem:[%s245] sm:$0xff]
        %266 = vrot.lane.b32.xlu0 %v264, 2
        %v267 = vpop.permute.xlu0 %266
        %vm269 = vcmask 1047568
        %270 = vst.msk [vmem:[#allocation2 + $0x8] sm:$0xff] %vm269, %v267
        %v271 = vld [vmem:[%s245] sm:$0xff]
        %272 = vst [vmem:[#allocation2 + $0x10] sm:$0xff] %v271
        %v273 = vld [vmem:[%s2] sm:$0xf]
        %v274 = vld [vmem:[%s2 + $0x4] sm:$0xf]
        %v275 = vld [vmem:[#allocation2] sm:$0xff]
        %v276 = vld [vmem:[#allocation2 + $0x8] sm:$0xff]
        %v277 = vld [vmem:[#allocation2 + $0x10] sm:$0xff]
        %v278 = vpack.c.bf16 %v276, %v275
        %v279 = vpack.c.bf16 %v277, %v277
        %v280 = vld [vmem:[%s3] sm:$0xff]
        %v281 = vld [vmem:[%s3 + $0x8] sm:$0xff]
        %283 = vset.pattern.permute.xlu0 0
        %284 = vperm.xlu0 %283, %v280
        %v285 = vpop.permute.xlu0 %284
        %288 = vset.pattern.permute.xlu0 0
        %289 = vperm.xlu0 %288, %v281
        %v290 = vpop.permute.xlu0 %289
        %v294 = vunpack.c.l.b16 %v273
        %v295 = vunpack.c.l.b16 %v274
        %v296 = vpack.c.b16 %v295, %v294
        %vm297 = vcmask 195584
        %v299 = vsel %vm297, %v296, 0
        %vm301 = vcmask 1043456
        %v303 = vsel %vm301, %v279, 0
        %305 = vmatprep.subr.bf16.mxu0 0
        %306 = vmatpush1.bf16.msra.mxu0 0
        %307 = vmatprep.subr.bf16.mxu0 0
        %308 = vmatpush1.bf16.msra.mxu0 0
        %309 = vmatprep.subr.bf16.mxu0 0
        %310 = vmatpush1.bf16.msra.mxu0 0
        %311 = vmatprep.subr.bf16.mxu0 0
        %312 = vmatpush1.bf16.msra.mxu0 0
        %313 = vmatprep.subr.bf16.mxu0 0
        %314 = vmatpush1.bf16.msra.mxu0 0
        %315 = vmatprep.subr.bf16.mxu0 0
        %316 = vmatpush1.bf16.msra.mxu0 0
        %317 = vmatprep.subr.bf16.mxu0 0
        %318 = vmatpush1.bf16.msra.mxu0 %v303
        %319 = vmatprep.subr.bf16.mxu0 0
        %320 = vmatpush1.bf16.msra.mxu0 %v278
        %321 = vmatprep.subr.bf16.mxu0 0
        %322 = vmatpush2.bf16.msra.mxu0 0
        %323 = vmatprep.subr.bf16.mxu0 0
        %324 = vmatpush2.bf16.msra.mxu0 0
        %325 = vmatprep.subr.bf16.mxu0 0
        %326 = vmatpush2.bf16.msra.mxu0 0
        %327 = vmatprep.subr.bf16.mxu0 0
        %328 = vmatpush2.bf16.msra.mxu0 0
        %329 = vmatprep.subr.bf16.mxu0 0
        %330 = vmatpush2.bf16.msra.mxu0 0
        %331 = vmatprep.subr.bf16.mxu0 0
        %332 = vmatpush2.bf16.msra.mxu0 0
        %333 = vmatprep.subr.bf16.mxu0 0
        %334 = vmatpush2.bf16.msra.mxu0 0
        %335 = vmatprep.subr.bf16.mxu0 0
        %336 = vmatpush2.bf16.msra.mxu0 0
        %337 = vmatprep.mubr.bf16.mxu0 0
        %338 = vmatmul.mubr.bf16.gmra.mxu0 %v299
        %v339 = vpop.f32.mrf.mxu0
        %v340 = vadd.f32 %v285, %v339
        %v341 = vpop.f32.mrf.mxu0
        %v342 = vpop.f32.mrf.mxu0
        %v343 = vadd.f32 %v290, %v342
        %v344 = vpop.f32.mrf.mxu0
        %345 = vdwg.mxu0
        %v346 = vmax.f32 %v340, 0.0
        %v347 = vmax.f32 %v343, 0.0
        %348 = vst [vmem:[%s231] sm:$0xff] %v346
        %349 = vst [vmem:[%s231 + $0x8] sm:$0xff] %v347
        %s350 = sand.u32 %s138, 1
        %s351 = scalar_lea.sflag [#allocation4], %s350
        %s352 = sand.u32 %s138, 1
        %s353 = smul.addr %s352, 16
        %s354 = scalar_lea.vmem [#allocation3], %s353
        // Predicated region
        $region37: #{tcn_block_forward.1} parent=35 // pred_check
          %p355 = pneg %p148
        $region38: #{tcn_block_forward.1} parent=35 // pred_check_branch
          %357 = sbr.rel (%p355) target = $region40
        $region39: #{tcn_block_forward.1} parent=35 // pred_region
          %s359 = ssub.s32 256, 256
          %360 = vsyncadd %s351, %s359
          %s361 = smul.addr %s22, 2
          %s362 = sadd.s32 %s23, %s361
          %s363 = smul.addr %s362, 128
          %s364 = scalar_lea.hbm %s4, %s363
          %s365 = sshll.u32 %s354, 4
          %s366 = int_to_ptr.vmem [resolvable:$true] %s365
          %371 = dma.vmem_to_hbm [thread:$0]  %s366, 256, %s364, %s351, 128, 128, 8
        $region40: #{tcn_block_forward.1} parent=35 // pred_fallthru
          _
      $region36: #{tcn_block_forward.1} parent=5 // pred_fallthru
        _
      %p372 = scmp.le.s32.totalorder 2, %s13
      // Predicated region
      $region41: #{tcn_block_forward.1} parent=5 // pred_check
        %p373 = pneg %p372
      $region42: #{tcn_block_forward.1} parent=5 // pred_check_branch
        %375 = sbr.rel (%p373) target = $region44
      $region43: #{tcn_block_forward.1} parent=5 // pred_region
        %s376 = ssub.s32 %s13, 2
        // Predicated region
        $region45: #{tcn_block_forward.1} parent=43 // pred_check
          %p377 = pneg %p154
        $region46: #{tcn_block_forward.1} parent=43 // pred_check_branch
          %379 = sbr.rel (%p377) target = $region48
        $region47: #{tcn_block_forward.1} parent=43 // pred_region
          %s380 = sand.u32 %s139, 1
          %s381 = scalar_lea.sflag [#allocation4], %s380
          %s382 = sand.u32 %s139, 1
          %s383 = smul.addr %s382, 16
          %s384 = scalar_lea.vmem [#allocation3], %s383
          %385 = dma.done %s381, 256
        $region48: #{tcn_block_forward.1} parent=43 // pred_fallthru
          _
      $region44: #{tcn_block_forward.1} parent=5 // pred_fallthru
        _
    $region6: #{tcn_block_forward.1} parent=1 // loop_footer
      %s17 = sadd.s32 1, %s13
    $region7: #{tcn_block_forward.1} parent=1 // loop_footer_branch
      %12 = sbr.rel target = $region3
    $region8: #{tcn_block_forward.1} parent=1 // loop_exit
      _
    %386 = vsyncpa [#allocation4], 1
    %s387 = scalar_lea.sflag [#allocation4], 1
    %388 = vsyncpa %s387, 1

</llo_original>
